<compile_context>
chip_gen: v5e
topology: v5e:2x2
jax: 0.10.0
libtpu: 0.0.40
codegen_flags: <defaults>
</compile_context>

<pallas_src>
import functools
import math

import jax
import jax.numpy as jnp
from jax.experimental import pallas as pl
from jax.experimental.pallas import tpu as pltpu

LANES = 128
SUBLANES = 8
CHUNK = SUBLANES * LANES  # 1024 elements == one f32 vreg


def _round_up(x, m):
    return (x + m - 1) // m * m


def _sqdiff_partial_kernel(a_ref, b_ref, o_ref, *, block_rows, sub_rows,
                           valid_rows, need_mask):
    """One grid step: (block_rows, 128) tile -> (1, 8, 128) partial sum of (a-b)^2.

    Sub-slice accumulating loop: each iteration loads a (sub_rows, 128) slice of
    each operand, casts, squares the difference and folds it into a single
    (8, 128) f32 accumulator with vreg adds (no full-tile temporaries).
    """
    num_sub = block_rows // sub_rows
    row0 = pl.program_id(0) * block_rows

    def body(s, acc):
        r = pl.multiple_of(s * sub_rows, sub_rows)
        av = a_ref[pl.ds(r, sub_rows), :].astype(jnp.float32)  # cast fused on VPU
        bv = b_ref[pl.ds(r, sub_rows), :].astype(jnp.float32)
        d = av - bv
        sq = d * d                                             # (sub_rows, 128) f32
        if need_mask:
            # Last grid block may extend past the true row extent; the OOB VMEM
            # contents are garbage (possibly NaN/Inf), so zero them with a
            # SELECT (not a multiply) so nothing propagates.
            ridx = row0 + r + jax.lax.broadcasted_iota(jnp.int32, sq.shape, 0)
            sq = jnp.where(ridx < valid_rows, sq, jnp.float32(0.0))
        # (sub_rows, 128) -> (8, 128): pure vreg-to-vreg adds, no XLU.
        return acc + sq.reshape(sub_rows // SUBLANES, SUBLANES, LANES).sum(axis=0)

    acc0 = jnp.zeros((SUBLANES, LANES), jnp.float32)
    acc = jax.lax.fori_loop(0, num_sub, body, acc0, unroll=True)
    o_ref[...] = acc.reshape(1, SUBLANES, LANES)


def concept_loss(masks, concept_layer, *, tile_rows=4096, sub_rows=128):
    """MSE(concept_layer, masks.float()) -> scalar f32 (matches torch.nn.MSELoss).

    Note: all partials accumulate in f32; for very large element counts (>~1e8)
    the result can drift slightly vs a pairwise/f64 reference (same ballpark as
    torch.nn.MSELoss).
    """
    assert masks.shape == concept_layer.shape, "mask / concept shapes must match"
    # Multiple of 32 keeps int8/uint8 (32,128) and bf16 (16,128) min tiles legal
    # for any tile_rows sweep; sub_rows must be a multiple of 8 for the vreg fold.
    assert tile_rows % 32 == 0
    assert sub_rows % SUBLANES == 0

    n_true = math.prod(concept_layer.shape)
    assert n_true > 0

    a = concept_layer.reshape(-1)          # native dtype, no wrapper cast
    b = masks.reshape(-1)                  # bool / int8 masks stay 1 byte/elem

    if n_true % CHUNK != 0:
        # TODO(synk): an element-granular in-kernel flat-index mask would make
        # non-1024-multiple sizes copy-free too; aligned inputs (the common
        # case, incl. this test) take the zero-copy path below.
        pad = _round_up(n_true, CHUNK) - n_true
        a = jnp.pad(a, (0, pad))
        b = jnp.pad(b, (0, pad))

    rows = a.shape[0] // LANES             # multiple of 8 by construction
    a2 = a.reshape(rows, LANES)            # bitcast: row-major, lane-dense
    b2 = b.reshape(rows, LANES)

    block_rows = min(tile_rows, rows)      # full-extent (always legal) or tile_rows
    grid_n = pl.cdiv(rows, block_rows)
    need_mask = (rows % block_rows) != 0   # only the ragged-last-block case
    sub = math.gcd(block_rows, sub_rows)   # multiple of 8, divides block_rows

    kernel = functools.partial(
        _sqdiff_partial_kernel,
        block_rows=block_rows,
        sub_rows=sub,
        valid_rows=rows,
        need_mask=need_mask,
    )

    partials = pl.pallas_call(
        kernel,
        out_shape=jax.ShapeDtypeStruct((grid_n, SUBLANES, LANES), jnp.float32),
        grid_spec=pltpu.PrefetchScalarGridSpec(
            num_scalar_prefetch=0,
            grid=(grid_n,),
            in_specs=[
                pl.BlockSpec((block_rows, LANES), lambda i: (i, 0)),
                pl.BlockSpec((block_rows, LANES), lambda i: (i, 0)),
            ],
            out_specs=pl.BlockSpec((1, SUBLANES, LANES), lambda i: (i, 0, 0)),
        ),
        compiler_params=pltpu.CompilerParams(
            # Independent per-block partials -> parallel grid axis (megacore /
            # both v7x TensorCores can split the row range).  On v7x consider
            # pltpu.CORE_PARALLEL and verify in the trace that both TCs run.
            dimension_semantics=("parallel",),
        ),
    )(a2, b2)

    # Padded zeros contribute 0 to the sum; divide by the TRUE element count.
    return jnp.sum(partials) / jnp.float32(n_true)


if __name__ == "__main__":
    key = jax.random.PRNGKey(0)
    k1, k2 = jax.random.split(key)

    B, C, H, W = 2, 4, 16, 16
    # concept_layer: float activations; masks: 0/1 segmentation mask (narrow int8).
    concept_layer = jax.random.normal(k1, (B, C, H, W), dtype=jnp.float32)
    masks = jax.random.randint(k2, (B, C, H, W), 0, 2, dtype=jnp.int32).astype(jnp.int8)

    loss = concept_loss(masks, concept_layer)
    jax.block_until_ready(loss)

    # Reference check against plain-JAX MSE (same semantics as torch.nn.MSELoss).
    ref = jnp.mean((concept_layer - masks.astype(jnp.float32)) ** 2)
    assert jnp.allclose(loss, ref, rtol=1e-5, atol=1e-6), (loss, ref)

    print("KERNEL_OK")
</pallas_src>

<mosaic_0001>
module attributes {stable_mosaic.version = 11 : i64} {
  func.func @_sqdiff_partial_kernel(%arg0: i32, %arg1: memref<16x128xf32, #tpu.memory_space<vmem>>, %arg2: memref<16x128xi8, #tpu.memory_space<vmem>>, %arg3: memref<1x8x128xf32, #tpu.memory_space<vmem>>) attributes {dimension_semantics = [#tpu.dimension_semantics<parallel>], iteration_bounds = array<i64: 1>, scalar_prefetch = 0 : i64, scratch_operands = 0 : i64, tpu.core_type = #tpu.core_type<tc>, window_params = [{transform_indices = @transform_0, window_bounds = array<i64: 16, 128>}, {transform_indices = @transform_1, window_bounds = array<i64: 16, 128>}, {transform_indices = @transform_2, window_bounds = array<i64: 1, 8, 128>}]} {
    %cst = arith.constant 0.000000e+00 : f32
    %0 = vector.broadcast %cst : f32 to vector<8x128xf32>
    %c0_i32 = arith.constant 0 : i32
    %c16_i32 = arith.constant 16 : i32
    %1 = arith.muli %c0_i32, %c16_i32 : i32
    %2 = tpu.assume_multiple %1, 16 : i32
    %3 = arith.index_cast %2 : i32 to index
    %c0 = arith.constant 0 : index
    %4 = vector.load %arg1[%3, %c0] : memref<16x128xf32, #tpu.memory_space<vmem>>, vector<16x128xf32>
    %5 = arith.index_cast %2 : i32 to index
    %c0_0 = arith.constant 0 : index
    %6 = vector.load %arg2[%5, %c0_0] : memref<16x128xi8, #tpu.memory_space<vmem>>, vector<16x128xi8>
    %7 = arith.sitofp %6 : vector<16x128xi8> to vector<16x128xf32>
    %8 = arith.subf %4, %7 : vector<16x128xf32>
    %9 = arith.mulf %8, %8 : vector<16x128xf32>
    %10 = vector.shape_cast %9 : vector<16x128xf32> to vector<2x8x128xf32>
    %cst_1 = arith.constant dense<0.000000e+00> : vector<8x128xf32>
    %11 = vector.multi_reduction <add>, %10, %cst_1 [0] : vector<2x8x128xf32> to vector<8x128xf32>
    %12 = arith.addf %0, %11 : vector<8x128xf32>
    %c1_i32 = arith.constant 1 : i32
    %13 = vector.shape_cast %12 : vector<8x128xf32> to vector<1x8x128xf32>
    %c0_2 = arith.constant 0 : index
    %c0_3 = arith.constant 0 : index
    %c0_4 = arith.constant 0 : index
    %14 = vector.load %arg3[%c0_2, %c0_3, %c0_4] : memref<1x8x128xf32, #tpu.memory_space<vmem>>, vector<1x8x128xf32>
    tpu.vector_store %arg3[%c0_2, %c0_3, %c0_4], %13 {strides = array<i32>} : memref<1x8x128xf32, #tpu.memory_space<vmem>>, vector<1x8x128xf32>,
    return
  }
  func.func @transform_0(%arg0: i32) -> (i32, i32) {
    %c0_i32 = arith.constant 0 : i32
    %c0_i32_0 = arith.constant 0 : i32
    return %arg0, %c0_i32 : i32, i32
  }
  func.func @transform_1(%arg0: i32) -> (i32, i32) {
    %c0_i32 = arith.constant 0 : i32
    %c0_i32_0 = arith.constant 0 : i32
    return %arg0, %c0_i32 : i32, i32
  }
  func.func @transform_2(%arg0: i32) -> (i32, i32, i32) {
    %c0_i32 = arith.constant 0 : i32
    %c0_i32_0 = arith.constant 0 : i32
    %c0_i32_1 = arith.constant 0 : i32
    return %arg0, %c0_i32, %c0_i32_0 : i32, i32, i32
  }
}

</mosaic_0001>

<llo_original>
// kernel: tpu_custom_call.1
$region0: #{tpu_custom_call.1}
  #allocation0 [shape = 'u32[]', space=smem, size = 0x4, offset = 0x4, fixed_abs, tag = 'smem constant byte address 0x4 - core index']
  #allocation1 [shape = 'u32[72,128]{1,0:T(1,128)}', space=vmem, size = 0x9000, scoped, tag = 'internal scratch']
  %s0 = inlined_call_operand.hbm [shape: f32[16,128], index: 0, kind: input, shape index: {}]
  %s1 = inlined_call_operand.hbm [shape: s8[16,128], index: 1, kind: input, shape index: {}]
  %s2 = inlined_call_operand.hbm [shape: f32[1,8,128], index: 2, kind: output, shape index: {}]
  %s3 = sld [smem:[#allocation0]]
  $region26: #{tpu_custom_call.1} parent=0
    _
  %s5 = ssub.s32 1, %s3
  %s6 = scalar_select 0, %s5, %s3
  $region1: #{tpu_custom_call.1} parent=0
    #allocation2 [shape = 'u8[8192]{0}', space=vmem, size = 0x2000, scoped, tag = 'input window, operand 0, single buffered']
    #allocation3 [shape = 's32[1]{0}', space=sflag, size = 0x4, scoped, tag = 'scoped memory for tpu_custom_call.1']
    #allocation4 [shape = 's32[1]{0}', space=sflag, size = 0x4, scoped, tag = 'scoped memory for tpu_custom_call.1']
    #allocation5 [shape = 'u8[2048]{0}', space=vmem, size = 0x800, scoped, tag = 'input window, operand 1, single buffered']
    #allocation6 [shape = 's32[1]{0}', space=sflag, size = 0x4, scoped, tag = 'scoped memory for tpu_custom_call.1']
    #allocation7 [shape = 'u8[4096]{0}', space=vmem, size = 0x1000, scoped, tag = 'output window, operand 0, single buffered']
    %7 = vsyncpa [#allocation3], 0
    %8 = vsyncpa [#allocation6], 0
    %9 = vsyncpa [#allocation4], 0
    // Predicated region
    $region2: #{tpu_custom_call.1} parent=1 // pred_check
      _
    $region3: #{tpu_custom_call.1} parent=1 // pred_check_branch
      %11 = sbr.rel (0) target = $region5
    $region4: #{tpu_custom_call.1} parent=1 // pred_region
      %13 = vsyncadd [#allocation3], 0
      %s14 = sshll.u32 %s0, 4
      %s15 = int_to_ptr.hbm [resolvable:$true] %s14
      %s16 = sshll.u32 [#allocation2], 4
      %s17 = int_to_ptr.vmem [resolvable:$true] %s16
      %22 = dma.hbm_to_vmem [thread:$0]  %s15, 256, %s17, [#allocation3], 128, 128, 8
    $region5: #{tpu_custom_call.1} parent=1 // pred_fallthru
      _
    // Predicated region
    $region6: #{tpu_custom_call.1} parent=1 // pred_check
      _
    $region7: #{tpu_custom_call.1} parent=1 // pred_check_branch
      %24 = sbr.rel (0) target = $region9
    $region8: #{tpu_custom_call.1} parent=1 // pred_region
      %26 = vsyncadd [#allocation6], 0
      %s27 = sshll.u32 %s1, 4
      %s28 = int_to_ptr.hbm [resolvable:$true] %s27
      %s29 = sshll.u32 [#allocation5], 4
      %s30 = int_to_ptr.vmem [resolvable:$true] %s29
      %35 = dma.hbm_to_vmem [thread:$0]  %s28, 64, %s30, [#allocation6], 32, 32, 2
    $region9: #{tpu_custom_call.1} parent=1 // pred_fallthru
      _
    // Predicated region
    $region10: #{tpu_custom_call.1} parent=1 // pred_check
      _
    $region11: #{tpu_custom_call.1} parent=1 // pred_check_branch
      %37 = sbr.rel (0) target = $region13
    $region12: #{tpu_custom_call.1} parent=1 // pred_region
      %39 = dma.done [#allocation3], 256
    $region13: #{tpu_custom_call.1} parent=1 // pred_fallthru
      _
    // Predicated region
    $region14: #{tpu_custom_call.1} parent=1 // pred_check
      _
    $region15: #{tpu_custom_call.1} parent=1 // pred_check_branch
      %41 = sbr.rel (0) target = $region17
    $region16: #{tpu_custom_call.1} parent=1 // pred_region
      %43 = dma.done [#allocation6], 64
    $region17: #{tpu_custom_call.1} parent=1 // pred_fallthru
      _
    %v44 = vld [vmem:[#allocation2] sm:$0xff]
    %v45 = vld [vmem:[#allocation2 + $0x8] sm:$0xff]
    %v46 = vld [vmem:[#allocation5] sm:$0x3]
    %v47 = vld [vmem:[#allocation5 + $0x2] sm:$0x3]
    %v48 = vunpack.c.0.s8 %v46
    %v49 = vunpack.c.0.s8 %v47
    %v50 = vcvt.s32.f32 %v48
    %v51 = vcvt.s32.f32 %v49
    %v52 = vsub.f32 %v44, %v50
    %v53 = vsub.f32 %v45, %v51
    %v54 = vmul.f32 %v52, %v52
    %v55 = vmul.f32 %v53, %v53
    %v56 = vadd.f32 %v54, %v55
    %v57 = vadd.f32 %v56, 0.0
    %58 = vst [vmem:[#allocation7] sm:$0xff] %v57
    // Predicated region
    $region18: #{tpu_custom_call.1} parent=1 // pred_check
      _
    $region19: #{tpu_custom_call.1} parent=1 // pred_check_branch
      %60 = sbr.rel (0) target = $region21
    $region20: #{tpu_custom_call.1} parent=1 // pred_region
      %62 = vsyncadd [#allocation4], 0
      %s64 = sshll.u32 [#allocation7], 4
      %s65 = int_to_ptr.vmem [resolvable:$true] %s64
      %s66 = sshll.u32 %s2, 4
      %s67 = int_to_ptr.hbm [resolvable:$true] %s66
      %69 = dma.vmem_to_hbm [thread:$0]  %s65, 128, %s67, [#allocation4]
    $region21: #{tpu_custom_call.1} parent=1 // pred_fallthru
      _
    // Predicated region
    $region22: #{tpu_custom_call.1} parent=1 // pred_check
      _
    $region23: #{tpu_custom_call.1} parent=1 // pred_check_branch
      %71 = sbr.rel (0) target = $region25
    $region24: #{tpu_custom_call.1} parent=1 // pred_region
      %73 = dma.done [#allocation4], 128
    $region25: #{tpu_custom_call.1} parent=1 // pred_fallthru
      _
    %74 = vsyncpa [#allocation3], 1
    %75 = vsyncpa [#allocation6], 1
    %76 = vsyncpa [#allocation4], 1

</llo_original>
